<compile_context>
chip_gen: v7x
topology: tpu7x:2x2x1
jax: 0.10.0
libtpu: 0.0.40
codegen_flags: <defaults>
</compile_context>

<pallas_src>
import functools

import jax
import jax.numpy as jnp
import numpy as np
from jax.experimental import pallas as pl
from jax.experimental.pallas import tpu as pltpu


def _round_up(x, m):
    return (x + m - 1) // m * m


# ----------------------------- Pallas kernel --------------------------------
def _pca_transform_kernel(x_ref, mean_ref, comp_ref, std_ref, o_ref, *, mxu_dtype):
    x = x_ref[0]          # (TN, d_p)
    mean = mean_ref[0]    # (1, d_p)
    comp = comp_ref[0]    # (d_p, k_p)
    std = std_ref[0]      # (1, k_p)

    # Fold 1/std into the components: (d_p x k_p) work once per grid step
    # instead of an (TN x k_p) divide per row tile.  Zero std follows torch
    # semantics (inf/NaN) -- caller guarantees k <= rank, padding uses std=1.
    inv_std = 1.0 / std                                          # (1, k_p)
    comp_scaled = comp * inv_std                                 # (d_p, k_p)

    # bias = mean @ (C/std): (1 x k_p) per grid step.
    bias = jnp.dot(mean, comp_scaled,
                   preferred_element_type=jnp.float32)           # (1, k_p)

    if mxu_dtype is not None:
        xm = x.astype(mxu_dtype)
        cm = comp_scaled.astype(mxu_dtype)
    else:
        xm = x
        cm = comp_scaled

    y = jnp.dot(xm, cm, preferred_element_type=jnp.float32) - bias   # (TN, k_p)
    o_ref[0] = y.astype(o_ref.dtype)


# ----------------------------- Tile selection --------------------------------
def _choose_row_tile(n, d_p, k_p, *, vmem_budget_bytes=12 << 20, max_rows=1024):
    """Largest multiple-of-8 row tile whose double-buffered working set fits the
    budget (budget chosen to be safe under v5e's 16 MiB / v7x's 32 MiB scoped
    VMEM defaults)."""
    bytes_per_elem = 4
    # resident (still double-buffered by Pallas): comp, mean, std
    fixed = 2 * bytes_per_elem * (d_p * k_p + d_p + k_p)
    # per output row: one X row + one out row, double-buffered
    per_row = 2 * bytes_per_elem * (d_p + k_p)
    avail = max(vmem_budget_bytes - fixed, 8 * per_row)
    tn = (avail // per_row) // 8 * 8
    tn = int(max(8, min(tn, max_rows, _round_up(n, 8))))
    return tn


# ----------------------------- Wrapper ---------------------------------------
def pca_transform(X, mean_, components_, std_, *, row_tile=None, mxu_dtype=None):
    """Batched PCA transform: ((X - mean_) @ components_) / std_."""
    b, n, d = X.shape
    k = components_.shape[-1]
    out_dtype = X.dtype

    # Lane-dense padding: d, k up to multiples of 128; n up to a multiple of
    # the row tile (multiple of 8).
    d_p = _round_up(d, 128)
    k_p = _round_up(k, 128)
    tn = row_tile if row_tile is not None else _choose_row_tile(n, d_p, k_p)
    tn = int(min(tn, _round_up(n, 8)))
    n_p = _round_up(n, tn)
    grid = (b, n_p // tn)

    f32 = jnp.float32
    Xp = jnp.pad(X.astype(f32), ((0, 0), (0, n_p - n), (0, d_p - d)))
    meanp = jnp.pad(mean_.astype(f32), ((0, 0), (0, 0), (0, d_p - d)))
    compp = jnp.pad(components_.astype(f32),
                    ((0, 0), (0, d_p - d), (0, k_p - k)))
    # Pad std with ones so padded output columns stay finite (sliced off below).
    stdp = jnp.pad(std_.astype(f32), ((0, 0), (0, 0), (0, k_p - k)),
                   constant_values=1.0)

    # Explicit scoped-VMEM limit derived from the actual (double-buffered) tile
    # working set, with headroom; safe on v5e/v6e/v7x.
    vmem_bytes = 4 * 2 * (tn * d_p + tn * k_p + d_p * k_p + d_p + k_p)
    vmem_limit = int(min(max(2 * vmem_bytes, 8 << 20), 64 << 20))

    cost = pl.CostEstimate(
        flops=2 * b * n_p * d_p * k_p,
        transcendentals=0,
        bytes_accessed=4 * b * (n_p * d_p + d_p * k_p + n_p * k_p + d_p + k_p),
    )

    kernel = functools.partial(_pca_transform_kernel, mxu_dtype=mxu_dtype)

    # TODO(synk): for very large d*k (working set >> VMEM budget) add a third
    # grid axis over d with an f32 VMEM accumulator (canonical pipelined matmul).
    out = pl.pallas_call(
        kernel,
        out_shape=jax.ShapeDtypeStruct((b, n_p, k_p), out_dtype),
        grid_spec=pltpu.PrefetchScalarGridSpec(
            num_scalar_prefetch=0,
            grid=grid,
            in_specs=[
                pl.BlockSpec((1, tn, d_p), lambda bi, ni: (bi, ni, 0)),
                pl.BlockSpec((1, 1, d_p), lambda bi, ni: (bi, 0, 0)),
                pl.BlockSpec((1, d_p, k_p), lambda bi, ni: (bi, 0, 0)),
                pl.BlockSpec((1, 1, k_p), lambda bi, ni: (bi, 0, 0)),
            ],
            out_specs=pl.BlockSpec((1, tn, k_p), lambda bi, ni: (bi, ni, 0)),
        ),
        compiler_params=pltpu.CompilerParams(
            dimension_semantics=("parallel", "parallel"),
            vmem_limit_bytes=vmem_limit,
        ),
        cost_estimate=cost,
    )(Xp, meanp, compp, stdp)

    return out[:, :n, :k]


# ----------------------------- Parameter setup (glue) -----------------------
def pca_fit(X, n_components):
    """Replicates PCA.fit in plain JAX (parameter/buffer setup, not the hot path)."""
    mean_ = X.mean(axis=1, keepdims=True)                    # (b, 1, d)
    Z = X - mean_
    U, S, Vh = jnp.linalg.svd(Z, full_matrices=False)        # Vh: (b, min(n,d), d)
    Vt = jnp.transpose(Vh, (0, 2, 1))[:, :, :n_components]   # (b, d, k)
    std_ = jnp.sqrt(S[:, :n_components])[:, None, :]         # (b, 1, k)
    return mean_, Vt, std_


if __name__ == "__main__":
    key = jax.random.PRNGKey(0)
    b, n, d = 2, 16, 32
    n_components = 8

    k1, k2 = jax.random.split(key)
    # "fit" data and "transform" data (same shapes, as in fit_transform usage)
    X_fit = jax.random.normal(k1, (b, n, d), dtype=jnp.float32)
    X = jax.random.normal(k2, (b, n, d), dtype=jnp.float32)

    mean_, components_, std_ = pca_fit(X_fit, n_components)

    out = pca_transform(X, mean_, components_, std_)
    out = jax.block_until_ready(out)

    # Reference check against plain JAX semantics of the torch.bmm path.
    ref = jnp.einsum("bnd,bdk->bnk", X - mean_, components_) / std_
    np.testing.assert_allclose(np.asarray(out), np.asarray(ref), rtol=1e-4, atol=1e-4)

    print("KERNEL_OK")
</pallas_src>

<mosaic_0001>
module attributes {stable_mosaic.version = 11 : i64} {
  func.func @_pca_transform_kernel(%arg0: i32, %arg1: i32, %arg2: memref<1x16x128xf32, #tpu.memory_space<vmem>>, %arg3: memref<1x1x128xf32, #tpu.memory_space<vmem>>, %arg4: memref<1x128x128xf32, #tpu.memory_space<vmem>>, %arg5: memref<1x1x128xf32, #tpu.memory_space<vmem>>, %arg6: memref<1x16x128xf32, #tpu.memory_space<vmem>>) attributes {dimension_semantics = [#tpu.dimension_semantics<parallel>, #tpu.dimension_semantics<parallel>], iteration_bounds = array<i64: 2, 1>, scalar_prefetch = 0 : i64, scratch_operands = 0 : i64, tpu.core_type = #tpu.core_type<tc>, window_params = [{transform_indices = @transform_0, window_bounds = array<i64: 1, 16, 128>}, {transform_indices = @transform_1, window_bounds = array<i64: 1, 1, 128>}, {transform_indices = @transform_2, window_bounds = array<i64: 1, 128, 128>}, {transform_indices = @transform_3, window_bounds = array<i64: 1, 1, 128>}, {transform_indices = @transform_4, window_bounds = array<i64: 1, 16, 128>}]} {
    %c0 = arith.constant 0 : index
    %c0_0 = arith.constant 0 : index
    %c0_1 = arith.constant 0 : index
    %0 = vector.load %arg2[%c0, %c0_0, %c0_1] : memref<1x16x128xf32, #tpu.memory_space<vmem>>, vector<1x16x128xf32>
    %1 = vector.shape_cast %0 : vector<1x16x128xf32> to vector<16x128xf32>
    %c0_2 = arith.constant 0 : index
    %c0_3 = arith.constant 0 : index
    %c0_4 = arith.constant 0 : index
    %2 = vector.load %arg3[%c0_2, %c0_3, %c0_4] : memref<1x1x128xf32, #tpu.memory_space<vmem>>, vector<1x1x128xf32>
    %3 = vector.shape_cast %2 : vector<1x1x128xf32> to vector<1x128xf32>
    %c0_5 = arith.constant 0 : index
    %c0_6 = arith.constant 0 : index
    %c0_7 = arith.constant 0 : index
    %4 = vector.load %arg4[%c0_5, %c0_6, %c0_7] : memref<1x128x128xf32, #tpu.memory_space<vmem>>, vector<1x128x128xf32>
    %5 = vector.shape_cast %4 : vector<1x128x128xf32> to vector<128x128xf32>
    %c0_8 = arith.constant 0 : index
    %c0_9 = arith.constant 0 : index
    %c0_10 = arith.constant 0 : index
    %6 = vector.load %arg5[%c0_8, %c0_9, %c0_10] : memref<1x1x128xf32, #tpu.memory_space<vmem>>, vector<1x1x128xf32>
    %7 = vector.shape_cast %6 : vector<1x1x128xf32> to vector<1x128xf32>
    %cst = arith.constant 1.000000e+00 : f32
    %8 = vector.broadcast %cst : f32 to vector<1x128xf32>
    %9 = arith.divf %8, %7 : vector<1x128xf32>
    %10 = vector.broadcast %9 : vector<1x128xf32> to vector<128x128xf32>
    %11 = arith.mulf %5, %10 : vector<128x128xf32>
    %cst_11 = arith.constant dense<0.000000e+00> : vector<1x128xf32>
    %12 = tpu.matmul %3, %11, %cst_11 {dimension_numbers = #tpu.dot_dimension_numbers<[1], [0], [0], [1], [0, 0, 1, 1], [], []>} : vector<1x128xf32>, vector<128x128xf32>, vector<1x128xf32> -> vector<1x128xf32>
    %cst_12 = arith.constant dense<0.000000e+00> : vector<16x128xf32>
    %13 = tpu.matmul %1, %11, %cst_12 {dimension_numbers = #tpu.dot_dimension_numbers<[1], [0], [0], [1], [0, 0, 1, 1], [], []>} : vector<16x128xf32>, vector<128x128xf32>, vector<16x128xf32> -> vector<16x128xf32>
    %14 = vector.broadcast %12 : vector<1x128xf32> to vector<16x128xf32>
    %15 = arith.subf %13, %14 : vector<16x128xf32>
    %c0_13 = arith.constant 0 : index
    %c0_14 = arith.constant 0 : index
    %c0_15 = arith.constant 0 : index
    %16 = vector.load %arg6[%c0_13, %c0_14, %c0_15] : memref<1x16x128xf32, #tpu.memory_space<vmem>>, vector<1x16x128xf32>
    %17 = vector.shape_cast %16 : vector<1x16x128xf32> to vector<16x128xf32>
    %18 = vector.shape_cast %15 : vector<16x128xf32> to vector<1x16x128xf32>
    tpu.vector_store %arg6[%c0_13, %c0_14, %c0_15], %18 {strides = array<i32>} : memref<1x16x128xf32, #tpu.memory_space<vmem>>, vector<1x16x128xf32>,
    return
  }
  func.func @transform_0(%arg0: i32, %arg1: i32) -> (i32, i32, i32) {
    %c0_i32 = arith.constant 0 : i32
    %c0_i32_0 = arith.constant 0 : i32
    return %arg0, %arg1, %c0_i32 : i32, i32, i32
  }
  func.func @transform_1(%arg0: i32, %arg1: i32) -> (i32, i32, i32) {
    %c0_i32 = arith.constant 0 : i32
    %c0_i32_0 = arith.constant 0 : i32
    %c0_i32_1 = arith.constant 0 : i32
    return %arg0, %c0_i32, %c0_i32_0 : i32, i32, i32
  }
  func.func @transform_2(%arg0: i32, %arg1: i32) -> (i32, i32, i32) {
    %c0_i32 = arith.constant 0 : i32
    %c0_i32_0 = arith.constant 0 : i32
    %c0_i32_1 = arith.constant 0 : i32
    return %arg0, %c0_i32, %c0_i32_0 : i32, i32, i32
  }
  func.func @transform_3(%arg0: i32, %arg1: i32) -> (i32, i32, i32) {
    %c0_i32 = arith.constant 0 : i32
    %c0_i32_0 = arith.constant 0 : i32
    %c0_i32_1 = arith.constant 0 : i32
    return %arg0, %c0_i32, %c0_i32_0 : i32, i32, i32
  }
  func.func @transform_4(%arg0: i32, %arg1: i32) -> (i32, i32, i32) {
    %c0_i32 = arith.constant 0 : i32
    %c0_i32_0 = arith.constant 0 : i32
    return %arg0, %arg1, %c0_i32 : i32, i32, i32
  }
}

</mosaic_0001>

<llo_original>
// kernel: tpu_custom_call.1
$region0: #{tpu_custom_call.1}
  #allocation0 [shape = 'u32[]', space=smem, size = 0x4, offset = 0x4, fixed_abs, tag = 'smem constant byte address 0x4 - core index']
  #allocation1 [shape = 'u32[144,128]{1,0:T(1,128)}', space=vmem, size = 0x12000, scoped, tag = 'internal scratch']
  %s0 = inlined_call_operand.hbm [shape: f32[2,16,128], index: 0, kind: input, shape index: {}]
  %s1 = inlined_call_operand.vmem [shape: f32[2,1,128], index: 1, kind: input, shape index: {}]
  %s2 = inlined_call_operand.hbm [shape: f32[2,128,128], index: 2, kind: input, shape index: {}]
  %s3 = inlined_call_operand.vmem [shape: f32[2,1,128], index: 3, kind: input, shape index: {}]
  %s4 = inlined_call_operand.hbm [shape: f32[2,16,128], index: 4, kind: output, shape index: {}]
  %s5 = sld [smem:[#allocation0]]
  $region57: #{tpu_custom_call.1} parent=0
    _
  %s7 = ssub.s32 1, %s5
  %s8 = scalar_select 0, %s7, %s5
  $region1: #{tpu_custom_call.1} parent=0
    #allocation2 [shape = 'u8[16384]{0}', space=vmem, size = 0x4000, scoped, tag = 'input window, operand 0']
    #allocation3 [shape = 's32[2]{0}', space=sflag, size = 0x8, scoped, tag = 'scoped memory for tpu_custom_call.1']
    #allocation4 [shape = 's32[2]{0}', space=sflag, size = 0x8, scoped, tag = 'scoped memory for tpu_custom_call.1']
    #allocation5 [shape = 'u8[131072]{0}', space=vmem, size = 0x20000, scoped, tag = 'input window, operand 2']
    #allocation6 [shape = 's32[2]{0}', space=sflag, size = 0x8, scoped, tag = 'scoped memory for tpu_custom_call.1']
    #allocation7 [shape = 'u8[16384]{0}', space=vmem, size = 0x4000, scoped, tag = 'output window, operand 0']
    %9 = vsyncpa [#allocation3], 0
    %s10 = scalar_lea.sflag [#allocation3], 1
    %11 = vsyncpa %s10, 0
    %12 = vsyncpa [#allocation6], 0
    %s13 = scalar_lea.sflag [#allocation6], 1
    %14 = vsyncpa %s13, 0
    %15 = vsyncpa [#allocation4], 0
    %s16 = scalar_lea.sflag [#allocation4], 1
    %17 = vsyncpa %s16, 0
    loop: start=0, step=1, limit=4
    $region2: #{tpu_custom_call.1} parent=1 // loop_pre_header
      _
    $region3: #{tpu_custom_call.1} parent=1 // loop_header
      %s19 = sphi 0, %s23
      %p20 = scmp.ge.s32.totalorder %s19, 4
      %s26 = sphi 0, %s38
      %s27 = sphi 0, %s34
      %s28 = sphi 0, %s26
      %s29 = sphi 0, %s27
      %s30 = sphi 0, %s28
      %s31 = sphi 0, %s29
      %s43 = sphi 0, %s45
      %s46 = sphi 0, %s43
      %s47 = sphi 0, %s46
      %s63 = sphi 0, %s47
      %s69 = sphi 0, %s71
      %s72 = sphi 0, %s69
      %s73 = sphi 0, %s72
      %s89 = sphi 0, %s73
      %s95 = sphi 0, %s97
      %s98 = sphi 0, %s95
      %s99 = sphi 0, %s98
      %s115 = sphi 0, %s99
      %s121 = sphi 0, %s123
      %s124 = sphi 0, %s121
      %s125 = sphi 0, %s124
      %s141 = sphi 0, %s125
      %s149 = sphi 0, %s151
      %s152 = sphi 0, %s149
      %s153 = sphi 0, %s152
      %s169 = sphi 0, %s153
    $region4: #{tpu_custom_call.1} parent=1 // loop_header_branch
      %22 = sbr.rel (%p20) target = $region8
    $region5: #{tpu_custom_call.1} parent=1 // loop_body
      %s24 = ssub.s32 %s19, 1
      %s25 = ssub.s32 %s19, 2
      %s32 = sadd.s32 1, %s27
      %p33 = scmp.ge.s32.totalorder %s32, 1
      %s34 = scalar_select %p33, 0, %s32
      %s35 = sadd.s32 1, %s26
      %s36 = scalar_select %p33, %s35, %s26
      %p37 = scmp.ge.s32.totalorder %s36, 2
      %s38 = scalar_select %p37, 0, %s36
      %s39 = ssub.s32 %s26, %s38
      %s40 = ssub.s32 %s27, %s34
      %s41 = sor.u32 %s39, %s40
      %p42 = scmp.eq.s32.totalorder %s41, 0
      %s44 = sadd.s32 %s43, 1
      %s45 = scalar_select %p42, %s43, %s44
      %p48 = pneg %p42
      %p49 = scmp.eq.s32.totalorder %s19, 1
      %p50 = por %p48, %p49
      %p51 = scmp.ne.s32.totalorder %s43, %s46
      %p52 = scmp.eq.s32.totalorder %s19, 0
      %p53 = por %p51, %p52
      %p54 = scmp.ne.s32.totalorder %s43, %s46
      %p55 = scmp.eq.s32.totalorder %s24, 1
      %p56 = por %p54, %p55
      %p57 = scmp.ne.s32.totalorder %s46, %s47
      %p58 = scmp.eq.s32.totalorder %s24, 0
      %p59 = por %p57, %p58
      %p60 = scmp.ne.s32.totalorder %s46, %s47
      %p61 = scmp.eq.s32.totalorder %s25, 1
      %p62 = por %p60, %p61
      %p64 = scmp.ne.s32.totalorder %s47, %s63
      %p65 = scmp.eq.s32.totalorder %s25, 0
      %p66 = por %p64, %p65
      %s67 = ssub.s32 %s26, %s38
      %p68 = scmp.eq.s32.totalorder %s67, 0
      %s70 = sadd.s32 %s69, 1
      %s71 = scalar_select %p68, %s69, %s70
      %p74 = pneg %p68
      %p75 = scmp.eq.s32.totalorder %s19, 1
      %p76 = por %p74, %p75
      %p77 = scmp.ne.s32.totalorder %s69, %s72
      %p78 = scmp.eq.s32.totalorder %s19, 0
      %p79 = por %p77, %p78
      %p80 = scmp.ne.s32.totalorder %s69, %s72
      %p81 = scmp.eq.s32.totalorder %s24, 1
      %p82 = por %p80, %p81
      %p83 = scmp.ne.s32.totalorder %s72, %s73
      %p84 = scmp.eq.s32.totalorder %s24, 0
      %p85 = por %p83, %p84
      %p86 = scmp.ne.s32.totalorder %s72, %s73
      %p87 = scmp.eq.s32.totalorder %s25, 1
      %p88 = por %p86, %p87
      %p90 = scmp.ne.s32.totalorder %s73, %s89
      %p91 = scmp.eq.s32.totalorder %s25, 0
      %p92 = por %p90, %p91
      %s93 = ssub.s32 %s26, %s38
      %p94 = scmp.eq.s32.totalorder %s93, 0
      %s96 = sadd.s32 %s95, 1
      %s97 = scalar_select %p94, %s95, %s96
      %p100 = pneg %p94
      %p101 = scmp.eq.s32.totalorder %s19, 1
      %p102 = por %p100, %p101
      %p103 = scmp.ne.s32.totalorder %s95, %s98
      %p104 = scmp.eq.s32.totalorder %s19, 0
      %p105 = por %p103, %p104
      %p106 = scmp.ne.s32.totalorder %s95, %s98
      %p107 = scmp.eq.s32.totalorder %s24, 1
      %p108 = por %p106, %p107
      %p109 = scmp.ne.s32.totalorder %s98, %s99
      %p110 = scmp.eq.s32.totalorder %s24, 0
      %p111 = por %p109, %p110
      %p112 = scmp.ne.s32.totalorder %s98, %s99
      %p113 = scmp.eq.s32.totalorder %s25, 1
      %p114 = por %p112, %p113
      %p116 = scmp.ne.s32.totalorder %s99, %s115
      %p117 = scmp.eq.s32.totalorder %s25, 0
      %p118 = por %p116, %p117
      %s119 = ssub.s32 %s26, %s38
      %p120 = scmp.eq.s32.totalorder %s119, 0
      %s122 = sadd.s32 %s121, 1
      %s123 = scalar_select %p120, %s121, %s122
      %p126 = pneg %p120
      %p127 = scmp.eq.s32.totalorder %s19, 1
      %p128 = por %p126, %p127
      %p129 = scmp.ne.s32.totalorder %s121, %s124
      %p130 = scmp.eq.s32.totalorder %s19, 0
      %p131 = por %p129, %p130
      %p132 = scmp.ne.s32.totalorder %s121, %s124
      %p133 = scmp.eq.s32.totalorder %s24, 1
      %p134 = por %p132, %p133
      %p135 = scmp.ne.s32.totalorder %s124, %s125
      %p136 = scmp.eq.s32.totalorder %s24, 0
      %p137 = por %p135, %p136
      %p138 = scmp.ne.s32.totalorder %s124, %s125
      %p139 = scmp.eq.s32.totalorder %s25, 1
      %p140 = por %p138, %p139
      %p142 = scmp.ne.s32.totalorder %s125, %s141
      %p143 = scmp.eq.s32.totalorder %s25, 0
      %p144 = por %p142, %p143
      %s145 = ssub.s32 %s26, %s38
      %s146 = ssub.s32 %s27, %s34
      %s147 = sor.u32 %s145, %s146
      %p148 = scmp.eq.s32.totalorder %s147, 0
      %s150 = sadd.s32 %s149, 1
      %s151 = scalar_select %p148, %s149, %s150
      %p154 = pneg %p148
      %p155 = scmp.eq.s32.totalorder %s19, 1
      %p156 = por %p154, %p155
      %p157 = scmp.ne.s32.totalorder %s149, %s152
      %p158 = scmp.eq.s32.totalorder %s19, 0
      %p159 = por %p157, %p158
      %p160 = scmp.ne.s32.totalorder %s149, %s152
      %p161 = scmp.eq.s32.totalorder %s24, 1
      %p162 = por %p160, %p161
      %p163 = scmp.ne.s32.totalorder %s152, %s153
      %p164 = scmp.eq.s32.totalorder %s24, 0
      %p165 = por %p163, %p164
      %p166 = scmp.ne.s32.totalorder %s152, %s153
      %p167 = scmp.eq.s32.totalorder %s25, 1
      %p168 = por %p166, %p167
      %p170 = scmp.ne.s32.totalorder %s153, %s169
      %p171 = scmp.eq.s32.totalorder %s25, 0
      %p172 = por %p170, %p171
      %p173 = scmp.le.s32.totalorder 1, %s19
      %p174 = scmp.lt.s32.totalorder %s19, 3
      %p175 = pnand %p173, %p174
      %p176 = pneg %p175
      // Predicated region
      $region9: #{tpu_custom_call.1} parent=5 // pred_check
        _
      $region10: #{tpu_custom_call.1} parent=5 // pred_check_branch
        %178 = sbr.rel (%p175) target = $region12
      $region11: #{tpu_custom_call.1} parent=5 // pred_region
        %s179 = ssub.s32 %s19, 1
      $region12: #{tpu_custom_call.1} parent=5 // pred_fallthru
        _
      %p180 = scmp.lt.s32.totalorder %s19, 2
      // Predicated region
      $region13: #{tpu_custom_call.1} parent=5 // pred_check
        %p181 = pneg %p180
      $region14: #{tpu_custom_call.1} parent=5 // pred_check_branch
        %183 = sbr.rel (%p181) target = $region16
      $region15: #{tpu_custom_call.1} parent=5 // pred_region
        // Predicated region
        $region17: #{tpu_custom_call.1} parent=15 // pred_check
          %p184 = pneg %p53
        $region18: #{tpu_custom_call.1} parent=15 // pred_check_branch
          %186 = sbr.rel (%p184) target = $region20
        $region19: #{tpu_custom_call.1} parent=15 // pred_region
          %s187 = sand.u32 %s43, 1
          %s188 = scalar_lea.sflag [#allocation3], %s187
          %s189 = sand.u32 %s43, 1
          %s190 = smul.addr %s189, 16
          %s191 = scalar_lea.vmem [#allocation2], %s190
          %s192 = smul.u32 2, %s27
          %s194 = ssub.s32 256, 256
          %195 = vsyncadd %s188, %s194
          %s196 = smul.addr %s26, 2
          %s197 = sadd.s32 %s192, %s196
          %s198 = smul.addr %s197, 128
          %s199 = scalar_lea.hbm %s0, %s198
          %s200 = sshll.u32 %s191, 4
          %s201 = int_to_ptr.vmem [resolvable:$true] %s200
          %206 = dma.hbm_to_vmem [thread:$0]  %s199, 256, %s201, %s188, 128, 128, 8
        $region20: #{tpu_custom_call.1} parent=15 // pred_fallthru
          _
        // Predicated region
        $region21: #{tpu_custom_call.1} parent=15 // pred_check
          %p207 = pneg %p79
        $region22: #{tpu_custom_call.1} parent=15 // pred_check_branch
          %209 = sbr.rel (%p207) target = $region24
        $region23: #{tpu_custom_call.1} parent=15 // pred_region
          %p210 = scmp.lt.s32.totalorder %s26, 1
          %s211 = scalar_select %p210, %s26, 1
          %s212 = scalar_lea.vmem %s1, %s211
        $region24: #{tpu_custom_call.1} parent=15 // pred_fallthru
          _
        // Predicated region
        $region25: #{tpu_custom_call.1} parent=15 // pred_check
          %p213 = pneg %p105
        $region26: #{tpu_custom_call.1} parent=15 // pred_check_branch
          %215 = sbr.rel (%p213) target = $region28
        $region27: #{tpu_custom_call.1} parent=15 // pred_region
          %s216 = sand.u32 %s95, 1
          %s217 = scalar_lea.sflag [#allocation6], %s216
          %s218 = sand.u32 %s95, 1
          %s219 = smul.addr %s218, 128
          %s220 = scalar_lea.vmem [#allocation5], %s219
          %s222 = ssub.s32 2048, 2048
          %223 = vsyncadd %s217, %s222
          %s224 = smul.addr %s26, 16
          %s225 = smul.addr %s224, 128
          %s226 = scalar_lea.hbm %s2, %s225
          %s227 = sshll.u32 %s220, 4
          %s228 = int_to_ptr.vmem [resolvable:$true] %s227
          %233 = dma.hbm_to_vmem [thread:$0]  %s226, 2048, %s228, %s217, 128, 128, 8
        $region28: #{tpu_custom_call.1} parent=15 // pred_fallthru
          _
        // Predicated region
        $region29: #{tpu_custom_call.1} parent=15 // pred_check
          %p234 = pneg %p131
        $region30: #{tpu_custom_call.1} parent=15 // pred_check_branch
          %236 = sbr.rel (%p234) target = $region32
        $region31: #{tpu_custom_call.1} parent=15 // pred_region
          %p237 = scmp.lt.s32.totalorder %s26, 1
          %s238 = scalar_select %p237, %s26, 1
          %s239 = scalar_lea.vmem %s3, %s238
        $region32: #{tpu_custom_call.1} parent=15 // pred_fallthru
          _
      $region16: #{tpu_custom_call.1} parent=5 // pred_fallthru
        _
      %p240 = scmp.le.s32.totalorder 1, %s19
      %p241 = scmp.lt.s32.totalorder %s19, 3
      %p242 = pnand %p240, %p241
      %p243 = pneg %p242
      // Predicated region
      $region33: #{tpu_custom_call.1} parent=5 // pred_check
        _
      $region34: #{tpu_custom_call.1} parent=5 // pred_check_branch
        %245 = sbr.rel (%p242) target = $region36
      $region35: #{tpu_custom_call.1} parent=5 // pred_region
        %s246 = ssub.s32 %s19, 1
        %s247 = sand.u32 %s46, 1
        %s248 = scalar_lea.sflag [#allocation3], %s247
        %s249 = sand.u32 %s46, 1
        %s250 = smul.addr %s249, 16
        %s251 = scalar_lea.vmem [#allocation2], %s250
        // Predicated region
        $region37: #{tpu_custom_call.1} parent=35 // pred_check
          %p252 = pneg %p59
        $region38: #{tpu_custom_call.1} parent=35 // pred_check_branch
          %254 = sbr.rel (%p252) target = $region40
        $region39: #{tpu_custom_call.1} parent=35 // pred_region
          %255 = dma.done %s248, 256
        $region40: #{tpu_custom_call.1} parent=35 // pred_fallthru
          _
        %s256 = sand.u32 %s98, 1
        %s257 = scalar_lea.sflag [#allocation6], %s256
        %s258 = sand.u32 %s98, 1
        %s259 = smul.addr %s258, 128
        %s260 = scalar_lea.vmem [#allocation5], %s259
        // Predicated region
        $region41: #{tpu_custom_call.1} parent=35 // pred_check
          %p261 = pneg %p111
        $region42: #{tpu_custom_call.1} parent=35 // pred_check_branch
          %263 = sbr.rel (%p261) target = $region44
        $region43: #{tpu_custom_call.1} parent=35 // pred_region
          %264 = dma.done %s257, 2048
        $region44: #{tpu_custom_call.1} parent=35 // pred_fallthru
          _
        %s265 = sand.u32 %s46, 1
        %s266 = scalar_lea.sflag [#allocation3], %s265
        %s267 = sand.u32 %s46, 1
        %s268 = smul.addr %s267, 16
        %s269 = scalar_lea.vmem [#allocation2], %s268
        %p270 = pneg %p59
        %p271 = pneg %p56
        %p272 = scmp.lt.s32.totalorder %s28, 1
        %s273 = scalar_select %p272, %s28, 1
        %s274 = scalar_lea.vmem %s1, %s273
        %p275 = pneg %p85
        %p276 = pneg %p82
        %s277 = sand.u32 %s98, 1
        %s278 = scalar_lea.sflag [#allocation6], %s277
        %s279 = sand.u32 %s98, 1
        %s280 = smul.addr %s279, 128
        %s281 = scalar_lea.vmem [#allocation5], %s280
        %p282 = pneg %p111
        %p283 = pneg %p108
        %p284 = scmp.lt.s32.totalorder %s28, 1
        %s285 = scalar_select %p284, %s28, 1
        %s286 = scalar_lea.vmem %s3, %s285
        %p287 = pneg %p137
        %p288 = pneg %p134
        %p289 = pneg %p165
        %p290 = pneg %p162
        %s291 = sand.u32 %s152, 1
        %s292 = scalar_lea.sflag [#allocation4], %s291
        %s293 = sand.u32 %s152, 1
        %s294 = smul.addr %s293, 16
        %s295 = scalar_lea.vmem [#allocation7], %s294
        %s296 = smul.u32 2, %s29
        %p297 = scmp.lt.s32.totalorder %s28, 1
        %s298 = scalar_select %p297, %s28, 1
        %s299 = scalar_lea.vmem %s1, %s298
        %p300 = scmp.lt.s32.totalorder %s28, 1
        %s301 = scalar_select %p300, %s28, 1
        %s302 = scalar_lea.vmem %s3, %s301
        %s303 = smul.u32 2, %s29
        %v304 = vld [vmem:[%s251] sm:$0xff]
        %v305 = vld [vmem:[%s251 + $0x8] sm:$0xff]
        %v306 = vld [vmem:[%s299] sm:$0x1]
        %v307 = vld [vmem:[%s260] sm:$0xff]
        %v308 = vld [vmem:[%s260 + $0x8] sm:$0xff]
        %v309 = vld [vmem:[%s260 + $0x10] sm:$0xff]
        %v310 = vld [vmem:[%s260 + $0x18] sm:$0xff]
        %v311 = vld [vmem:[%s260 + $0x20] sm:$0xff]
        %v312 = vld [vmem:[%s260 + $0x28] sm:$0xff]
        %v313 = vld [vmem:[%s260 + $0x30] sm:$0xff]
        %v314 = vld [vmem:[%s260 + $0x38] sm:$0xff]
        %v315 = vld [vmem:[%s260 + $0x40] sm:$0xff]
        %v316 = vld [vmem:[%s260 + $0x48] sm:$0xff]
        %v317 = vld [vmem:[%s260 + $0x50] sm:$0xff]
        %v318 = vld [vmem:[%s260 + $0x58] sm:$0xff]
        %v319 = vld [vmem:[%s260 + $0x60] sm:$0xff]
        %v320 = vld [vmem:[%s260 + $0x68] sm:$0xff]
        %v321 = vld [vmem:[%s260 + $0x70] sm:$0xff]
        %v322 = vld [vmem:[%s260 + $0x78] sm:$0xff]
        %v323 = vld [vmem:[%s302] sm:$0x1]
        %v324 = vrcp.pop %v323
        %v325 = vmul.f32 1.0, %v324
        %v327 = vlaneseq
        %v328 = vshrl.u32 %v327, 7
        %v329 = vsub.s32 0, %v328
        %v330 = vrot.slane %v325, %v329
        %v332 = vmul.f32 %v307, %v330
        %v333 = vmul.f32 %v308, %v330
        %v334 = vmul.f32 %v309, %v330
        %v335 = vmul.f32 %v310, %v330
        %v336 = vmul.f32 %v311, %v330
        %v337 = vmul.f32 %v312, %v330
        %v338 = vmul.f32 %v313, %v330
        %v339 = vmul.f32 %v314, %v330
        %v340 = vmul.f32 %v315, %v330
        %v341 = vmul.f32 %v316, %v330
        %v342 = vmul.f32 %v317, %v330
        %v343 = vmul.f32 %v318, %v330
        %v344 = vmul.f32 %v319, %v330
        %v345 = vmul.f32 %v320, %v330
        %v346 = vmul.f32 %v321, %v330
        %v347 = vmul.f32 %v322, %v330
        %348 = vmatprep.subr.mxu0 0.0
        %349 = vmatpush1.msra.mxu0 %v332
        %350 = vmatprep.subr.mxu0 0.0
        %351 = vmatpush1.msra.mxu0 %v333
        %352 = vmatprep.subr.mxu0 0.0
        %353 = vmatpush1.msra.mxu0 %v334
        %354 = vmatprep.subr.mxu0 0.0
        %355 = vmatpush1.msra.mxu0 %v335
        %356 = vmatprep.subr.mxu0 0.0
        %357 = vmatpush1.msra.mxu0 %v336
        %358 = vmatprep.subr.mxu0 0.0
        %359 = vmatpush1.msra.mxu0 %v337
        %360 = vmatprep.subr.mxu0 0.0
        %361 = vmatpush1.msra.mxu0 %v338
        %362 = vmatprep.subr.mxu0 0.0
        %363 = vmatpush1.msra.mxu0 %v339
        %364 = vmatprep.subr.mxu0 0.0
        %365 = vmatpush1.msra.mxu0 %v340
        %366 = vmatprep.subr.mxu0 0.0
        %367 = vmatpush1.msra.mxu0 %v341
        %368 = vmatprep.subr.mxu0 0.0
        %369 = vmatpush1.msra.mxu0 %v342
        %370 = vmatprep.subr.mxu0 0.0
        %371 = vmatpush1.msra.mxu0 %v343
        %372 = vmatprep.subr.mxu0 0.0
        %373 = vmatpush1.msra.mxu0 %v344
        %374 = vmatprep.subr.mxu0 0.0
        %375 = vmatpush1.msra.mxu0 %v345
        %376 = vmatprep.subr.mxu0 0.0
        %377 = vmatpush1.msra.mxu0 %v346
        %378 = vmatprep.subr.mxu0 0.0
        %379 = vmatpush1.msra.mxu0 %v347
        %380 = vmatprep.subr.mxu0 0.0
        %381 = vmatpush1.msra.mxu0 0.0
        %382 = vmatprep.subr.mxu0 0.0
        %383 = vmatpush1.msra.mxu0 0.0
        %384 = vmatprep.subr.mxu0 0.0
        %385 = vmatpush1.msra.mxu0 0.0
        %386 = vmatprep.subr.mxu0 0.0
        %387 = vmatpush1.msra.mxu0 0.0
        %388 = vmatprep.subr.mxu0 0.0
        %389 = vmatpush1.msra.mxu0 0.0
        %390 = vmatprep.subr.mxu0 0.0
        %391 = vmatpush1.msra.mxu0 0.0
        %392 = vmatprep.subr.mxu0 0.0
        %393 = vmatpush1.msra.mxu0 0.0
        %394 = vmatprep.subr.mxu0 0.0
        %395 = vmatpush1.msra.mxu0 0.0
        %396 = vmatprep.subr.mxu0 0.0
        %397 = vmatpush1.msra.mxu0 0.0
        %398 = vmatprep.subr.mxu0 0.0
        %399 = vmatpush1.msra.mxu0 0.0
        %400 = vmatprep.subr.mxu0 0.0
        %401 = vmatpush1.msra.mxu0 0.0
        %402 = vmatprep.subr.mxu0 0.0
        %403 = vmatpush1.msra.mxu0 0.0
        %404 = vmatprep.subr.mxu0 0.0
        %405 = vmatpush1.msra.mxu0 0.0
        %406 = vmatprep.subr.mxu0 0.0
        %407 = vmatpush1.msra.mxu0 0.0
        %408 = vmatprep.subr.mxu0 0.0
        %409 = vmatpush1.msra.mxu0 0.0
        %410 = vmatprep.subr.mxu0 0.0
        %411 = vmatpush1.msra.mxu0 0.0
        %412 = vmatprep.mubr.f32.mxu0 0.0
        %413 = vmatmul.mubr.f32.gmra.mrb[0].mxu0 %v306
        %v414 = vpop.f32.mrb[0].mxu0
        %v415 = vadd.f32 0.0, %v414
        %v416 = vpop.f32.mrb[0].mxu0
        %417 = vdwg.mxu0
        %418 = vmatprep.subr.mxu0 0.0
        %419 = vmatpush1.msra.mxu0 %v332
        %420 = vmatprep.subr.mxu0 0.0
        %421 = vmatpush1.msra.mxu0 %v333
        %422 = vmatprep.subr.mxu0 0.0
        %423 = vmatpush1.msra.mxu0 %v334
        %424 = vmatprep.subr.mxu0 0.0
        %425 = vmatpush1.msra.mxu0 %v335
        %426 = vmatprep.subr.mxu0 0.0
        %427 = vmatpush1.msra.mxu0 %v336
        %428 = vmatprep.subr.mxu0 0.0
        %429 = vmatpush1.msra.mxu0 %v337
        %430 = vmatprep.subr.mxu0 0.0
        %431 = vmatpush1.msra.mxu0 %v338
        %432 = vmatprep.subr.mxu0 0.0
        %433 = vmatpush1.msra.mxu0 %v339
        %434 = vmatprep.subr.mxu0 0.0
        %435 = vmatpush1.msra.mxu0 %v340
        %436 = vmatprep.subr.mxu0 0.0
        %437 = vmatpush1.msra.mxu0 %v341
        %438 = vmatprep.subr.mxu0 0.0
        %439 = vmatpush1.msra.mxu0 %v342
        %440 = vmatprep.subr.mxu0 0.0
        %441 = vmatpush1.msra.mxu0 %v343
        %442 = vmatprep.subr.mxu0 0.0
        %443 = vmatpush1.msra.mxu0 %v344
        %444 = vmatprep.subr.mxu0 0.0
        %445 = vmatpush1.msra.mxu0 %v345
        %446 = vmatprep.subr.mxu0 0.0
        %447 = vmatpush1.msra.mxu0 %v346
        %448 = vmatprep.subr.mxu0 0.0
        %449 = vmatpush1.msra.mxu0 %v347
        %450 = vmatprep.subr.mxu0 0.0
        %451 = vmatpush1.msra.mxu0 0.0
        %452 = vmatprep.subr.mxu0 0.0
        %453 = vmatpush1.msra.mxu0 0.0
        %454 = vmatprep.subr.mxu0 0.0
        %455 = vmatpush1.msra.mxu0 0.0
        %456 = vmatprep.subr.mxu0 0.0
        %457 = vmatpush1.msra.mxu0 0.0
        %458 = vmatprep.subr.mxu0 0.0
        %459 = vmatpush1.msra.mxu0 0.0
        %460 = vmatprep.subr.mxu0 0.0
        %461 = vmatpush1.msra.mxu0 0.0
        %462 = vmatprep.subr.mxu0 0.0
        %463 = vmatpush1.msra.mxu0 0.0
        %464 = vmatprep.subr.mxu0 0.0
        %465 = vmatpush1.msra.mxu0 0.0
        %466 = vmatprep.subr.mxu0 0.0
        %467 = vmatpush1.msra.mxu0 0.0
        %468 = vmatprep.subr.mxu0 0.0
        %469 = vmatpush1.msra.mxu0 0.0
        %470 = vmatprep.subr.mxu0 0.0
        %471 = vmatpush1.msra.mxu0 0.0
        %472 = vmatprep.subr.mxu0 0.0
        %473 = vmatpush1.msra.mxu0 0.0
        %474 = vmatprep.subr.mxu0 0.0
        %475 = vmatpush1.msra.mxu0 0.0
        %476 = vmatprep.subr.mxu0 0.0
        %477 = vmatpush1.msra.mxu0 0.0
        %478 = vmatprep.subr.mxu0 0.0
        %479 = vmatpush1.msra.mxu0 0.0
        %480 = vmatprep.subr.mxu0 0.0
        %481 = vmatpush1.msra.mxu0 0.0
        %482 = vmatprep.mubr.f32.mxu0 0.0
        %483 = vmatmul.mubr.f32.gmra.mrb[0].mxu0 %v304
        %v484 = vpop.f32.mrb[0].mxu0
        %v485 = vadd.f32 0.0, %v484
        %v486 = vpop.f32.mrb[0].mxu0
        %487 = vmatprep.mubr.f32.mxu0 0.0
        %488 = vmatmul.mubr.f32.gmra.mrb[0].mxu0 %v305
        %v489 = vpop.f32.mrb[0].mxu0
        %v490 = vadd.f32 0.0, %v489
        %v491 = vpop.f32.mrb[0].mxu0
        %492 = vdwg.mxu0
        %v493 = vlaneseq
        %v494 = vshrl.u32 %v493, 7
        %v495 = vsub.s32 0, %v494
        %v496 = vrot.slane %v415, %v495
        %v497 = vsub.f32 %v485, %v496
        %v498 = vsub.f32 %v490, %v496
        %499 = vst [vmem:[%s295] sm:$0xff] %v497
        %500 = vst [vmem:[%s295 + $0x8] sm:$0xff] %v498
        %s501 = sand.u32 %s152, 1
        %s502 = scalar_lea.sflag [#allocation4], %s501
        %s503 = sand.u32 %s152, 1
        %s504 = smul.addr %s503, 16
        %s505 = scalar_lea.vmem [#allocation7], %s504
        // Predicated region
        $region45: #{tpu_custom_call.1} parent=35 // pred_check
          %p506 = pneg %p162
        $region46: #{tpu_custom_call.1} parent=35 // pred_check_branch
          %508 = sbr.rel (%p506) target = $region48
        $region47: #{tpu_custom_call.1} parent=35 // pred_region
          %s509 = smul.u32 2, %s29
          %s511 = ssub.s32 256, 256
          %512 = vsyncadd %s502, %s511
          %s513 = smul.addr %s28, 2
          %s514 = sadd.s32 %s509, %s513
          %s515 = smul.addr %s514, 128
          %s516 = scalar_lea.hbm %s4, %s515
          %s517 = sshll.u32 %s505, 4
          %s518 = int_to_ptr.vmem [resolvable:$true] %s517
          %523 = dma.vmem_to_hbm [thread:$0]  %s518, 256, %s516, %s502, 128, 128, 8
        $region48: #{tpu_custom_call.1} parent=35 // pred_fallthru
          _
      $region36: #{tpu_custom_call.1} parent=5 // pred_fallthru
        _
      %p524 = scmp.le.s32.totalorder 2, %s19
      // Predicated region
      $region49: #{tpu_custom_call.1} parent=5 // pred_check
        %p525 = pneg %p524
      $region50: #{tpu_custom_call.1} parent=5 // pred_check_branch
        %527 = sbr.rel (%p525) target = $region52
      $region51: #{tpu_custom_call.1} parent=5 // pred_region
        %s528 = ssub.s32 %s19, 2
        // Predicated region
        $region53: #{tpu_custom_call.1} parent=51 // pred_check
          %p529 = pneg %p168
        $region54: #{tpu_custom_call.1} parent=51 // pred_check_branch
          %531 = sbr.rel (%p529) target = $region56
        $region55: #{tpu_custom_call.1} parent=51 // pred_region
          %s532 = sand.u32 %s153, 1
          %s533 = scalar_lea.sflag [#allocation4], %s532
          %s534 = sand.u32 %s153, 1
          %s535 = smul.addr %s534, 16
          %s536 = scalar_lea.vmem [#allocation7], %s535
          %537 = dma.done %s533, 256
        $region56: #{tpu_custom_call.1} parent=51 // pred_fallthru
          _
      $region52: #{tpu_custom_call.1} parent=5 // pred_fallthru
        _
    $region6: #{tpu_custom_call.1} parent=1 // loop_footer
      %s23 = sadd.s32 1, %s19
    $region7: #{tpu_custom_call.1} parent=1 // loop_footer_branch
      %18 = sbr.rel target = $region3
    $region8: #{tpu_custom_call.1} parent=1 // loop_exit
      _
    %538 = vsyncpa [#allocation3], 1
    %s539 = scalar_lea.sflag [#allocation3], 1
    %540 = vsyncpa %s539, 1
    %541 = vsyncpa [#allocation6], 1
    %s542 = scalar_lea.sflag [#allocation6], 1
    %543 = vsyncpa %s542, 1
    %544 = vsyncpa [#allocation4], 1
    %s545 = scalar_lea.sflag [#allocation4], 1
    %546 = vsyncpa %s545, 1

</llo_original>
